<compile_context>
chip_gen: v7x
topology: tpu7x:2x2x1
jax: 0.10.0
libtpu: 0.0.40
codegen_flags: <defaults>
</compile_context>

<pallas_src>
import jax
import jax.numpy as jnp
from jax.experimental import pallas as pl
from jax.experimental.pallas import tpu as pltpu

IN_F = 784
H1_F = 256
H2_F = 32
NUM_CLASSES = 10
OUT_PAD = 128          # lane-dense padded logits width
DEFAULT_TB = 2048      # batch tile (double-buffered f32 x tiles + temps ~20 MB < 32 MiB)


def _round_up(n, m):
    return ((n + m - 1) // m) * m


def mlp_softmax_kernel(x_ref, w1_ref, b1_ref, w2_ref, b2_ref, w3_ref, b3_ref, o_ref):
    # x_ref: (TB, 784) batch tile in its native dtype; cast to bf16 here (in-kernel)
    # so the HBM->VMEM DMA carries whatever the caller already has — no extra pass.
    x = x_ref[...].astype(jnp.bfloat16)

    # Layer 1: bf16 x bf16 on the MXU, f32 accumulation, f32 bias.
    h1 = jnp.dot(x, w1_ref[...], preferred_element_type=jnp.float32) + b1_ref[...]
    h1 = jnp.maximum(h1, 0.0).astype(jnp.bfloat16)          # F.relu, bf16 for next MXU op
    # x.flatten(start_dim=1) from the PyTorch module is a no-op: already (B, 256).

    # Layer 2: bf16 x bf16 MXU, f32 accumulation.
    h2 = jnp.dot(h1, w2_ref[...], preferred_element_type=jnp.float32) + b2_ref[...]
    h2 = jnp.maximum(h2, 0.0).astype(jnp.bfloat16)          # F.relu

    # Layer 3 padded to 128 lanes; padded columns carry a -1e30 f32 bias so exp()
    # underflows to exactly 0 and the softmax equals the 10-class softmax.
    logits = jnp.dot(h2, w3_ref[...], preferred_element_type=jnp.float32) + b3_ref[...]

    # F.softmax(logits, dim=1), numerically stabilized, f32 math, bf16 store.
    m = jnp.max(logits, axis=-1, keepdims=True)
    e = jnp.exp(logits - m)
    s = jnp.sum(e, axis=-1, keepdims=True)
    o_ref[...] = (e * pl.reciprocal(s, approx=True)).astype(o_ref.dtype)


def prepare_params(w1, b1, w2, b2, w3, b3):
    """One-time conversion from PyTorch layout (out, in) to kernel layout (in, out)."""
    w1t = w1.T.astype(jnp.bfloat16)                       # (784, 256) bf16
    b1r = b1.reshape(1, -1).astype(jnp.float32)           # (1, 256)   f32
    w2t = w2.T.astype(jnp.bfloat16)                       # (256, 32)  bf16
    b2r = b2.reshape(1, -1).astype(jnp.float32)           # (1, 32)    f32
    # Pad layer-3 to 128 output lanes for a lane-dense store; weight pad = 0 (bf16),
    # bias pad = -1e30 kept in f32 so masking/precision is unaffected.
    w3t = (jnp.zeros((H2_F, OUT_PAD), jnp.float32)
           .at[:, :NUM_CLASSES].set(w3.T)).astype(jnp.bfloat16)
    b3r = jnp.full((1, OUT_PAD), -1e30, jnp.float32).at[0, :NUM_CLASSES].set(
        b3.astype(jnp.float32))
    return w1t, b1r, w2t, b2r, w3t, b3r


def _choose_tiling(B, block_b):
    if B <= 16:
        # Single block covering the whole (tiny) batch; full-dim blocks are always legal.
        return B, B
    TB = min(block_b, _round_up(B, 16))
    if B >= 32:
        # Guarantee >= 2 grid steps so ("parallel",) can shard across v7x's 2 TCs.
        TB = min(TB, _round_up((B + 1) // 2, 16))
    Bp = _round_up(B, TB)
    return TB, Bp


def mlp_forward(x, w1t, b1r, w2t, b2r, w3t, b3r, block_b=DEFAULT_TB):
    """x: (B, 784), f32 or bf16 (cast happens in-kernel). Returns (B, 10) bf16 softmax."""
    B = x.shape[0]
    TB, Bp = _choose_tiling(B, block_b)

    if Bp != B:
        # Only for batch sizes not divisible by the tile; padded rows are sliced off.
        x = jnp.pad(x, ((0, Bp - B), (0, 0)))

    out = pl.pallas_call(
        mlp_softmax_kernel,
        out_shape=jax.ShapeDtypeStruct((Bp, OUT_PAD), jnp.bfloat16),
        grid=(Bp // TB,),
        in_specs=[
            pl.BlockSpec((TB, IN_F), lambda i: (i, 0)),        # batch-tiled input
            pl.BlockSpec(w1t.shape, lambda i: (0, 0)),         # weights resident
            pl.BlockSpec(b1r.shape, lambda i: (0, 0)),
            pl.BlockSpec(w2t.shape, lambda i: (0, 0)),
            pl.BlockSpec(b2r.shape, lambda i: (0, 0)),
            pl.BlockSpec(w3t.shape, lambda i: (0, 0)),
            pl.BlockSpec(b3r.shape, lambda i: (0, 0)),
        ],
        out_specs=pl.BlockSpec((TB, OUT_PAD), lambda i: (i, 0)),
        compiler_params=pltpu.CompilerParams(
            dimension_semantics=("parallel",),                 # megacore / v7x 2-TC shard
            vmem_limit_bytes=32 * 1024 * 1024,
        ),
    )(x, w1t, b1r, w2t, b2r, w3t, b3r)

    # Convenience narrow view; consumers that can, should use the padded slab directly.
    return out[:B, :NUM_CLASSES]


def init_params(key):
    # Deterministic, PyTorch-Linear-like uniform init: U(-1/sqrt(fan_in), 1/sqrt(fan_in))
    def linear(k, out_f, in_f):
        kw, kb = jax.random.split(k)
        bound = 1.0 / jnp.sqrt(jnp.float32(in_f))
        w = jax.random.uniform(kw, (out_f, in_f), jnp.float32, -bound, bound)
        b = jax.random.uniform(kb, (out_f,), jnp.float32, -bound, bound)
        return w, b

    k1, k2, k3 = jax.random.split(key, 3)
    w1, b1 = linear(k1, H1_F, IN_F)
    w2, b2 = linear(k2, H2_F, H1_F)
    w3, b3 = linear(k3, NUM_CLASSES, H2_F)
    return w1, b1, w2, b2, w3, b3


def reference_forward(x, w1, b1, w2, b2, w3, b3):
    h1 = jnp.maximum(x @ w1.T + b1, 0.0)
    h2 = jnp.maximum(h1 @ w2.T + b2, 0.0)
    logits = h2 @ w3.T + b3
    return jax.nn.softmax(logits, axis=1)


if __name__ == "__main__":
    key = jax.random.PRNGKey(0)
    k_params, k_x = jax.random.split(key)
    w1, b1, w2, b2, w3, b3 = init_params(k_params)
    params = prepare_params(w1, b1, w2, b2, w3, b3)

    B = 8
    x = jax.random.normal(k_x, (B, IN_F), dtype=jnp.float32)

    out = mlp_forward(x, *params)
    out = jax.block_until_ready(out)

    assert out.shape == (B, NUM_CLASSES)
    out_f32 = out.astype(jnp.float32)
    # Softmax rows sum to 1 (loose tol: bf16 matmul inputs/outputs + approx reciprocal).
    assert jnp.allclose(jnp.sum(out_f32, axis=1), 1.0, atol=2e-2)
    # Matches the pure-f32 reference closely.
    ref = reference_forward(x, w1, b1, w2, b2, w3, b3)
    assert jnp.max(jnp.abs(out_f32 - ref)) < 3e-2

    print("KERNEL_OK")
</pallas_src>

<mosaic_0001>
module attributes {stable_mosaic.version = 11 : i64} {
  func.func @mlp_softmax_kernel(%arg0: i32, %arg1: memref<8x784xf32, #tpu.memory_space<vmem>>, %arg2: memref<784x256xbf16, #tpu.memory_space<vmem>>, %arg3: memref<1x256xf32, #tpu.memory_space<vmem>>, %arg4: memref<256x32xbf16, #tpu.memory_space<vmem>>, %arg5: memref<1x32xf32, #tpu.memory_space<vmem>>, %arg6: memref<32x128xbf16, #tpu.memory_space<vmem>>, %arg7: memref<1x128xf32, #tpu.memory_space<vmem>>, %arg8: memref<8x128xbf16, #tpu.memory_space<vmem>>) attributes {dimension_semantics = [#tpu.dimension_semantics<parallel>], iteration_bounds = array<i64: 1>, scalar_prefetch = 0 : i64, scratch_operands = 0 : i64, tpu.core_type = #tpu.core_type<tc>, window_params = [{transform_indices = @transform_0, window_bounds = array<i64: 8, 784>}, {pipeline_mode = #tpu.pipeline_mode<synchronous>, transform_indices = @transform_1, window_bounds = array<i64: 784, 256>}, {pipeline_mode = #tpu.pipeline_mode<synchronous>, transform_indices = @transform_2, window_bounds = array<i64: 1, 256>}, {pipeline_mode = #tpu.pipeline_mode<synchronous>, transform_indices = @transform_3, window_bounds = array<i64: 256, 32>}, {pipeline_mode = #tpu.pipeline_mode<synchronous>, transform_indices = @transform_4, window_bounds = array<i64: 1, 32>}, {pipeline_mode = #tpu.pipeline_mode<synchronous>, transform_indices = @transform_5, window_bounds = array<i64: 32, 128>}, {pipeline_mode = #tpu.pipeline_mode<synchronous>, transform_indices = @transform_6, window_bounds = array<i64: 1, 128>}, {transform_indices = @transform_7, window_bounds = array<i64: 8, 128>}]} {
    %c0 = arith.constant 0 : index
    %c0_0 = arith.constant 0 : index
    %0 = vector.load %arg1[%c0, %c0_0] : memref<8x784xf32, #tpu.memory_space<vmem>>, vector<8x784xf32>
    %1 = arith.truncf %0 : vector<8x784xf32> to vector<8x784xbf16>
    %c0_1 = arith.constant 0 : index
    %c0_2 = arith.constant 0 : index
    %2 = vector.load %arg2[%c0_1, %c0_2] : memref<784x256xbf16, #tpu.memory_space<vmem>>, vector<784x256xbf16>
    %cst = arith.constant dense<0.000000e+00> : vector<8x256xf32>
    %3 = tpu.matmul %1, %2, %cst {dimension_numbers = #tpu.dot_dimension_numbers<[1], [0], [0], [1], [0, 0, 1, 1], [], []>} : vector<8x784xbf16>, vector<784x256xbf16>, vector<8x256xf32> -> vector<8x256xf32>
    %c0_3 = arith.constant 0 : index
    %c0_4 = arith.constant 0 : index
    %4 = vector.load %arg3[%c0_3, %c0_4] : memref<1x256xf32, #tpu.memory_space<vmem>>, vector<1x256xf32>
    %5 = vector.broadcast %4 : vector<1x256xf32> to vector<8x256xf32>
    %6 = arith.addf %3, %5 : vector<8x256xf32>
    %cst_5 = arith.constant 0.000000e+00 : f32
    %7 = vector.broadcast %cst_5 : f32 to vector<8x256xf32>
    %8 = arith.maximumf %6, %7 : vector<8x256xf32>
    %9 = arith.truncf %8 : vector<8x256xf32> to vector<8x256xbf16>
    %c0_6 = arith.constant 0 : index
    %c0_7 = arith.constant 0 : index
    %10 = vector.load %arg4[%c0_6, %c0_7] : memref<256x32xbf16, #tpu.memory_space<vmem>>, vector<256x32xbf16>
    %cst_8 = arith.constant dense<0.000000e+00> : vector<8x32xf32>
    %11 = tpu.matmul %9, %10, %cst_8 {dimension_numbers = #tpu.dot_dimension_numbers<[1], [0], [0], [1], [0, 0, 1, 1], [], []>} : vector<8x256xbf16>, vector<256x32xbf16>, vector<8x32xf32> -> vector<8x32xf32>
    %c0_9 = arith.constant 0 : index
    %c0_10 = arith.constant 0 : index
    %12 = vector.load %arg5[%c0_9, %c0_10] : memref<1x32xf32, #tpu.memory_space<vmem>>, vector<1x32xf32>
    %13 = vector.broadcast %12 : vector<1x32xf32> to vector<8x32xf32>
    %14 = arith.addf %11, %13 : vector<8x32xf32>
    %cst_11 = arith.constant 0.000000e+00 : f32
    %15 = vector.broadcast %cst_11 : f32 to vector<8x32xf32>
    %16 = arith.maximumf %14, %15 : vector<8x32xf32>
    %17 = arith.truncf %16 : vector<8x32xf32> to vector<8x32xbf16>
    %c0_12 = arith.constant 0 : index
    %c0_13 = arith.constant 0 : index
    %18 = vector.load %arg6[%c0_12, %c0_13] : memref<32x128xbf16, #tpu.memory_space<vmem>>, vector<32x128xbf16>
    %cst_14 = arith.constant dense<0.000000e+00> : vector<8x128xf32>
    %19 = tpu.matmul %17, %18, %cst_14 {dimension_numbers = #tpu.dot_dimension_numbers<[1], [0], [0], [1], [0, 0, 1, 1], [], []>} : vector<8x32xbf16>, vector<32x128xbf16>, vector<8x128xf32> -> vector<8x128xf32>
    %c0_15 = arith.constant 0 : index
    %c0_16 = arith.constant 0 : index
    %20 = vector.load %arg7[%c0_15, %c0_16] : memref<1x128xf32, #tpu.memory_space<vmem>>, vector<1x128xf32>
    %21 = vector.broadcast %20 : vector<1x128xf32> to vector<8x128xf32>
    %22 = arith.addf %19, %21 : vector<8x128xf32>
    %cst_17 = arith.constant dense<0xFF800000> : vector<8xf32>
    %23 = vector.multi_reduction <maximumf>, %22, %cst_17 [1] : vector<8x128xf32> to vector<8xf32>
    %24 = vector.shape_cast %23 : vector<8xf32> to vector<8x1xf32>
    %25 = vector.broadcast %24 : vector<8x1xf32> to vector<8x128xf32>
    %26 = arith.subf %22, %25 : vector<8x128xf32>
    %27 = math.exp %26 : vector<8x128xf32>
    %cst_18 = arith.constant dense<0.000000e+00> : vector<8xf32>
    %28 = vector.multi_reduction <add>, %27, %cst_18 [1] : vector<8x128xf32> to vector<8xf32>
    %29 = vector.shape_cast %28 : vector<8xf32> to vector<8x1xf32>
    %30 = tpu.reciprocal %29 {approx = true} : vector<8x1xf32> -> vector<8x1xf32>
    %31 = vector.broadcast %30 : vector<8x1xf32> to vector<8x128xf32>
    %32 = arith.mulf %27, %31 : vector<8x128xf32>
    %33 = arith.truncf %32 : vector<8x128xf32> to vector<8x128xbf16>
    %c0_19 = arith.constant 0 : index
    %c0_20 = arith.constant 0 : index
    %34 = vector.load %arg8[%c0_19, %c0_20] : memref<8x128xbf16, #tpu.memory_space<vmem>>, vector<8x128xbf16>
    tpu.vector_store %arg8[%c0_19, %c0_20], %33 {strides = array<i32>} : memref<8x128xbf16, #tpu.memory_space<vmem>>, vector<8x128xbf16>,
    return
  }
  func.func @transform_0(%arg0: i32) -> (i32, i32) {
    %c0_i32 = arith.constant 0 : i32
    %c0_i32_0 = arith.constant 0 : i32
    return %arg0, %c0_i32 : i32, i32
  }
  func.func @transform_1(%arg0: i32) -> (i32, i32) {
    %c0_i32 = arith.constant 0 : i32
    %c0_i32_0 = arith.constant 0 : i32
    %c0_i32_1 = arith.constant 0 : i32
    return %c0_i32, %c0_i32_0 : i32, i32
  }
  func.func @transform_2(%arg0: i32) -> (i32, i32) {
    %c0_i32 = arith.constant 0 : i32
    %c0_i32_0 = arith.constant 0 : i32
    %c0_i32_1 = arith.constant 0 : i32
    return %c0_i32, %c0_i32_0 : i32, i32
  }
  func.func @transform_3(%arg0: i32) -> (i32, i32) {
    %c0_i32 = arith.constant 0 : i32
    %c0_i32_0 = arith.constant 0 : i32
    %c0_i32_1 = arith.constant 0 : i32
    return %c0_i32, %c0_i32_0 : i32, i32
  }
  func.func @transform_4(%arg0: i32) -> (i32, i32) {
    %c0_i32 = arith.constant 0 : i32
    %c0_i32_0 = arith.constant 0 : i32
    %c0_i32_1 = arith.constant 0 : i32
    return %c0_i32, %c0_i32_0 : i32, i32
  }
  func.func @transform_5(%arg0: i32) -> (i32, i32) {
    %c0_i32 = arith.constant 0 : i32
    %c0_i32_0 = arith.constant 0 : i32
    %c0_i32_1 = arith.constant 0 : i32
    return %c0_i32, %c0_i32_0 : i32, i32
  }
  func.func @transform_6(%arg0: i32) -> (i32, i32) {
    %c0_i32 = arith.constant 0 : i32
    %c0_i32_0 = arith.constant 0 : i32
    %c0_i32_1 = arith.constant 0 : i32
    return %c0_i32, %c0_i32_0 : i32, i32
  }
  func.func @transform_7(%arg0: i32) -> (i32, i32) {
    %c0_i32 = arith.constant 0 : i32
    %c0_i32_0 = arith.constant 0 : i32
    return %arg0, %c0_i32 : i32, i32
  }
}

</mosaic_0001>

<llo_original>
// kernel: tpu_custom_call.1
$region0: #{tpu_custom_call.1}
  #allocation0 [shape = 'u32[]', space=smem, size = 0x4, offset = 0x4, fixed_abs, tag = 'smem constant byte address 0x4 - core index']
  #allocation1 [shape = 'u32[144,128]{1,0:T(1,128)}', space=vmem, size = 0x12000, scoped, tag = 'internal scratch']
  %s0 = inlined_call_operand.vmem [shape: f32[8,784], index: 0, kind: input, shape index: {}]
  %s1 = inlined_call_operand.hbm [shape: bf16[784,256], index: 1, kind: input, shape index: {}]
  %s2 = inlined_call_operand.vmem [shape: f32[1,256], index: 2, kind: input, shape index: {}]
  %s3 = inlined_call_operand.vmem [shape: bf16[256,32], index: 3, kind: input, shape index: {}]
  %s4 = inlined_call_operand.vmem [shape: f32[1,32], index: 4, kind: input, shape index: {}]
  %s5 = inlined_call_operand.vmem [shape: bf16[32,128], index: 5, kind: input, shape index: {}]
  %s6 = inlined_call_operand.vmem [shape: f32[1,128], index: 6, kind: input, shape index: {}]
  %s7 = inlined_call_operand.hbm [shape: bf16[8,128], index: 7, kind: output, shape index: {}]
  %s8 = sld [smem:[#allocation0]]
  $region42: #{tpu_custom_call.1} parent=0
    _
  %s10 = ssub.s32 1, %s8
  %s11 = scalar_select 0, %s10, %s8
  $region1: #{tpu_custom_call.1} parent=0
    #allocation2 [shape = 'u8[401408]{0}', space=vmem, size = 0x62000, scoped, tag = 'input window, operand 1, single buffered']
    #allocation3 [shape = 's32[1]{0}', space=sflag, size = 0x4, scoped, tag = 'scoped memory for tpu_custom_call.1']
    #allocation4 [shape = 's32[1]{0}', space=sflag, size = 0x4, scoped, tag = 'scoped memory for tpu_custom_call.1']
    #allocation5 [shape = 'u8[2048]{0}', space=vmem, size = 0x800, scoped, tag = 'output window, operand 0, single buffered']
    %12 = vsyncpa [#allocation3], 0
    %13 = vsyncpa [#allocation4], 0
    // Predicated region
    $region2: #{tpu_custom_call.1} parent=1 // pred_check
      _
    $region3: #{tpu_custom_call.1} parent=1 // pred_check_branch
      %15 = sbr.rel (0) target = $region5
    $region4: #{tpu_custom_call.1} parent=1 // pred_region
      _
    $region5: #{tpu_custom_call.1} parent=1 // pred_fallthru
      _
    // Predicated region
    $region6: #{tpu_custom_call.1} parent=1 // pred_check
      _
    $region7: #{tpu_custom_call.1} parent=1 // pred_check_branch
      %17 = sbr.rel (0) target = $region9
    $region8: #{tpu_custom_call.1} parent=1 // pred_region
      %s19 = ssub.s32 12544, 12544
      %20 = vsyncadd [#allocation3], %s19
      %s21 = sshll.u32 [#allocation2], 4
      %s22 = int_to_ptr.vmem [resolvable:$true] %s21
      %27 = dma.hbm_to_vmem [thread:$0]  %s1, 12544, %s22, [#allocation3], 128, 128, 8
    $region9: #{tpu_custom_call.1} parent=1 // pred_fallthru
      _
    // Predicated region
    $region10: #{tpu_custom_call.1} parent=1 // pred_check
      _
    $region11: #{tpu_custom_call.1} parent=1 // pred_check_branch
      %29 = sbr.rel (0) target = $region13
    $region12: #{tpu_custom_call.1} parent=1 // pred_region
      _
    $region13: #{tpu_custom_call.1} parent=1 // pred_fallthru
      _
    // Predicated region
    $region14: #{tpu_custom_call.1} parent=1 // pred_check
      _
    $region15: #{tpu_custom_call.1} parent=1 // pred_check_branch
      %31 = sbr.rel (0) target = $region17
    $region16: #{tpu_custom_call.1} parent=1 // pred_region
      _
    $region17: #{tpu_custom_call.1} parent=1 // pred_fallthru
      _
    // Predicated region
    $region18: #{tpu_custom_call.1} parent=1 // pred_check
      _
    $region19: #{tpu_custom_call.1} parent=1 // pred_check_branch
      %33 = sbr.rel (0) target = $region21
    $region20: #{tpu_custom_call.1} parent=1 // pred_region
      _
    $region21: #{tpu_custom_call.1} parent=1 // pred_fallthru
      _
    // Predicated region
    $region22: #{tpu_custom_call.1} parent=1 // pred_check
      _
    $region23: #{tpu_custom_call.1} parent=1 // pred_check_branch
      %35 = sbr.rel (0) target = $region25
    $region24: #{tpu_custom_call.1} parent=1 // pred_region
      _
    $region25: #{tpu_custom_call.1} parent=1 // pred_fallthru
      _
    // Predicated region
    $region26: #{tpu_custom_call.1} parent=1 // pred_check
      _
    $region27: #{tpu_custom_call.1} parent=1 // pred_check_branch
      %37 = sbr.rel (0) target = $region29
    $region28: #{tpu_custom_call.1} parent=1 // pred_region
      _
    $region29: #{tpu_custom_call.1} parent=1 // pred_fallthru
      _
    // Predicated region
    $region30: #{tpu_custom_call.1} parent=1 // pred_check
      _
    $region31: #{tpu_custom_call.1} parent=1 // pred_check_branch
      %39 = sbr.rel (0) target = $region33
    $region32: #{tpu_custom_call.1} parent=1 // pred_region
      %40 = dma.done [#allocation3], 12544
    $region33: #{tpu_custom_call.1} parent=1 // pred_fallthru
      _
    %v42 = vld [vmem:[%s0] sm:$0xff]
    %v43 = vld [vmem:[%s0 + $0x8] sm:$0xff]
    %v44 = vld [vmem:[%s0 + $0x10] sm:$0xff]
    %v45 = vld [vmem:[%s0 + $0x18] sm:$0xff]
    %v46 = vld [vmem:[%s0 + $0x20] sm:$0xff]
    %v47 = vld [vmem:[%s0 + $0x28] sm:$0xff]
    %v48 = vld [vmem:[%s0 + $0x30] sm:$0xff]
    %v49 = vpack.c.bf16 %v42, %v42
    %v50 = vpack.c.bf16 %v43, %v43
    %v51 = vpack.c.bf16 %v44, %v44
    %v52 = vpack.c.bf16 %v45, %v45
    %v53 = vpack.c.bf16 %v46, %v46
    %v54 = vpack.c.bf16 %v47, %v47
    %v55 = vpack.c.bf16 %v48, %v48
    %v56 = vld [vmem:[#allocation2] sm:$0xff]
    %v57 = vld [vmem:[#allocation2 + $0x8] sm:$0xff]
    %v58 = vld [vmem:[#allocation2 + $0x10] sm:$0xff]
    %v59 = vld [vmem:[#allocation2 + $0x18] sm:$0xff]
    %v60 = vld [vmem:[#allocation2 + $0x20] sm:$0xff]
    %v61 = vld [vmem:[#allocation2 + $0x28] sm:$0xff]
    %v62 = vld [vmem:[#allocation2 + $0x30] sm:$0xff]
    %v63 = vld [vmem:[#allocation2 + $0x38] sm:$0xff]
    %v64 = vld [vmem:[#allocation2 + $0x40] sm:$0xff]
    %v65 = vld [vmem:[#allocation2 + $0x48] sm:$0xff]
    %v66 = vld [vmem:[#allocation2 + $0x50] sm:$0xff]
    %v67 = vld [vmem:[#allocation2 + $0x58] sm:$0xff]
    %v68 = vld [vmem:[#allocation2 + $0x60] sm:$0xff]
    %v69 = vld [vmem:[#allocation2 + $0x68] sm:$0xff]
    %v70 = vld [vmem:[#allocation2 + $0x70] sm:$0xff]
    %v71 = vld [vmem:[#allocation2 + $0x78] sm:$0xff]
    %v72 = vld [vmem:[#allocation2 + $0x80] sm:$0xff]
    %v73 = vld [vmem:[#allocation2 + $0x88] sm:$0xff]
    %v74 = vld [vmem:[#allocation2 + $0x90] sm:$0xff]
    %v75 = vld [vmem:[#allocation2 + $0x98] sm:$0xff]
    %v76 = vld [vmem:[#allocation2 + $0xa0] sm:$0xff]
    %v77 = vld [vmem:[#allocation2 + $0xa8] sm:$0xff]
    %v78 = vld [vmem:[#allocation2 + $0xb0] sm:$0xff]
    %v79 = vld [vmem:[#allocation2 + $0xb8] sm:$0xff]
    %v80 = vld [vmem:[#allocation2 + $0xc0] sm:$0xff]
    %v81 = vld [vmem:[#allocation2 + $0xc8] sm:$0xff]
    %v82 = vld [vmem:[#allocation2 + $0xd0] sm:$0xff]
    %v83 = vld [vmem:[#allocation2 + $0xd8] sm:$0xff]
    %v84 = vld [vmem:[#allocation2 + $0xe0] sm:$0xff]
    %v85 = vld [vmem:[#allocation2 + $0xe8] sm:$0xff]
    %v86 = vld [vmem:[#allocation2 + $0xf0] sm:$0xff]
    %v87 = vld [vmem:[#allocation2 + $0xf8] sm:$0xff]
    %v88 = vld [vmem:[#allocation2 + $0x100] sm:$0xff]
    %v89 = vld [vmem:[#allocation2 + $0x108] sm:$0xff]
    %v90 = vld [vmem:[#allocation2 + $0x110] sm:$0xff]
    %v91 = vld [vmem:[#allocation2 + $0x118] sm:$0xff]
    %v92 = vld [vmem:[#allocation2 + $0x120] sm:$0xff]
    %v93 = vld [vmem:[#allocation2 + $0x128] sm:$0xff]
    %v94 = vld [vmem:[#allocation2 + $0x130] sm:$0xff]
    %v95 = vld [vmem:[#allocation2 + $0x138] sm:$0xff]
    %v96 = vld [vmem:[#allocation2 + $0x140] sm:$0xff]
    %v97 = vld [vmem:[#allocation2 + $0x148] sm:$0xff]
    %v98 = vld [vmem:[#allocation2 + $0x150] sm:$0xff]
    %v99 = vld [vmem:[#allocation2 + $0x158] sm:$0xff]
    %v100 = vld [vmem:[#allocation2 + $0x160] sm:$0xff]
    %v101 = vld [vmem:[#allocation2 + $0x168] sm:$0xff]
    %v102 = vld [vmem:[#allocation2 + $0x170] sm:$0xff]
    %v103 = vld [vmem:[#allocation2 + $0x178] sm:$0xff]
    %v104 = vld [vmem:[#allocation2 + $0x180] sm:$0xff]
    %v105 = vld [vmem:[#allocation2 + $0x188] sm:$0xff]
    %v106 = vld [vmem:[#allocation2 + $0x190] sm:$0xff]
    %v107 = vld [vmem:[#allocation2 + $0x198] sm:$0xff]
    %v108 = vld [vmem:[#allocation2 + $0x1a0] sm:$0xff]
    %v109 = vld [vmem:[#allocation2 + $0x1a8] sm:$0xff]
    %v110 = vld [vmem:[#allocation2 + $0x1b0] sm:$0xff]
    %v111 = vld [vmem:[#allocation2 + $0x1b8] sm:$0xff]
    %v112 = vld [vmem:[#allocation2 + $0x1c0] sm:$0xff]
    %v113 = vld [vmem:[#allocation2 + $0x1c8] sm:$0xff]
    %v114 = vld [vmem:[#allocation2 + $0x1d0] sm:$0xff]
    %v115 = vld [vmem:[#allocation2 + $0x1d8] sm:$0xff]
    %v116 = vld [vmem:[#allocation2 + $0x1e0] sm:$0xff]
    %v117 = vld [vmem:[#allocation2 + $0x1e8] sm:$0xff]
    %v118 = vld [vmem:[#allocation2 + $0x1f0] sm:$0xff]
    %v119 = vld [vmem:[#allocation2 + $0x1f8] sm:$0xff]
    %v120 = vld [vmem:[#allocation2 + $0x200] sm:$0xff]
    %v121 = vld [vmem:[#allocation2 + $0x208] sm:$0xff]
    %v122 = vld [vmem:[#allocation2 + $0x210] sm:$0xff]
    %v123 = vld [vmem:[#allocation2 + $0x218] sm:$0xff]
    %v124 = vld [vmem:[#allocation2 + $0x220] sm:$0xff]
    %v125 = vld [vmem:[#allocation2 + $0x228] sm:$0xff]
    %v126 = vld [vmem:[#allocation2 + $0x230] sm:$0xff]
    %v127 = vld [vmem:[#allocation2 + $0x238] sm:$0xff]
    %v128 = vld [vmem:[#allocation2 + $0x240] sm:$0xff]
    %v129 = vld [vmem:[#allocation2 + $0x248] sm:$0xff]
    %v130 = vld [vmem:[#allocation2 + $0x250] sm:$0xff]
    %v131 = vld [vmem:[#allocation2 + $0x258] sm:$0xff]
    %v132 = vld [vmem:[#allocation2 + $0x260] sm:$0xff]
    %v133 = vld [vmem:[#allocation2 + $0x268] sm:$0xff]
    %v134 = vld [vmem:[#allocation2 + $0x270] sm:$0xff]
    %v135 = vld [vmem:[#allocation2 + $0x278] sm:$0xff]
    %v136 = vld [vmem:[#allocation2 + $0x280] sm:$0xff]
    %v137 = vld [vmem:[#allocation2 + $0x288] sm:$0xff]
    %v138 = vld [vmem:[#allocation2 + $0x290] sm:$0xff]
    %v139 = vld [vmem:[#allocation2 + $0x298] sm:$0xff]
    %v140 = vld [vmem:[#allocation2 + $0x2a0] sm:$0xff]
    %v141 = vld [vmem:[#allocation2 + $0x2a8] sm:$0xff]
    %v142 = vld [vmem:[#allocation2 + $0x2b0] sm:$0xff]
    %v143 = vld [vmem:[#allocation2 + $0x2b8] sm:$0xff]
    %v144 = vld [vmem:[#allocation2 + $0x2c0] sm:$0xff]
    %v145 = vld [vmem:[#allocation2 + $0x2c8] sm:$0xff]
    %v146 = vld [vmem:[#allocation2 + $0x2d0] sm:$0xff]
    %v147 = vld [vmem:[#allocation2 + $0x2d8] sm:$0xff]
    %v148 = vld [vmem:[#allocation2 + $0x2e0] sm:$0xff]
    %v149 = vld [vmem:[#allocation2 + $0x2e8] sm:$0xff]
    %v150 = vld [vmem:[#allocation2 + $0x2f0] sm:$0xff]
    %v151 = vld [vmem:[#allocation2 + $0x2f8] sm:$0xff]
    %v152 = vld [vmem:[#allocation2 + $0x300] sm:$0xff]
    %v153 = vld [vmem:[#allocation2 + $0x308] sm:$0xff]
    %v154 = vld [vmem:[%s2] sm:$0x3]
    %v156 = vlaneseq
    %v157 = vshrl.u32 %v156, 7
    %v158 = vsub.s32 0, %v157
    %v159 = vrot.slane %v154, %v158
    %v160 = vlaneseq
    %v161 = vshrl.u32 %v160, 7
    %v162 = vsub.s32 1, %v161
    %v163 = vrot.slane %v154, %v162
    %v264 = vunpack.c.l.b16 %v56
    %v265 = vunpack.c.h.b16 %v56
    %v266 = vunpack.c.l.b16 %v57
    %v267 = vunpack.c.h.b16 %v57
    %v268 = vunpack.c.l.b16 %v58
    %v269 = vunpack.c.h.b16 %v58
    %v270 = vunpack.c.l.b16 %v59
    %v271 = vunpack.c.h.b16 %v59
    %v272 = vunpack.c.l.b16 %v60
    %v273 = vunpack.c.h.b16 %v60
    %v274 = vunpack.c.l.b16 %v61
    %v275 = vunpack.c.h.b16 %v61
    %v276 = vunpack.c.l.b16 %v62
    %v277 = vunpack.c.h.b16 %v62
    %v278 = vunpack.c.l.b16 %v63
    %v279 = vunpack.c.h.b16 %v63
    %v280 = vunpack.c.l.b16 %v64
    %v281 = vunpack.c.h.b16 %v64
    %v282 = vunpack.c.l.b16 %v65
    %v283 = vunpack.c.h.b16 %v65
    %v284 = vunpack.c.l.b16 %v66
    %v285 = vunpack.c.h.b16 %v66
    %v286 = vunpack.c.l.b16 %v67
    %v287 = vunpack.c.h.b16 %v67
    %v288 = vunpack.c.l.b16 %v68
    %v289 = vunpack.c.h.b16 %v68
    %v290 = vunpack.c.l.b16 %v69
    %v291 = vunpack.c.h.b16 %v69
    %v292 = vunpack.c.l.b16 %v70
    %v293 = vunpack.c.h.b16 %v70
    %v294 = vunpack.c.l.b16 %v71
    %v295 = vunpack.c.h.b16 %v71
    %v296 = vunpack.c.l.b16 %v72
    %v297 = vunpack.c.h.b16 %v72
    %v298 = vunpack.c.l.b16 %v73
    %v299 = vunpack.c.h.b16 %v73
    %v300 = vunpack.c.l.b16 %v74
    %v301 = vunpack.c.h.b16 %v74
    %v302 = vunpack.c.l.b16 %v75
    %v303 = vunpack.c.h.b16 %v75
    %v304 = vunpack.c.l.b16 %v76
    %v305 = vunpack.c.h.b16 %v76
    %v306 = vunpack.c.l.b16 %v77
    %v307 = vunpack.c.h.b16 %v77
    %v308 = vunpack.c.l.b16 %v78
    %v309 = vunpack.c.h.b16 %v78
    %v310 = vunpack.c.l.b16 %v79
    %v311 = vunpack.c.h.b16 %v79
    %v312 = vunpack.c.l.b16 %v80
    %v313 = vunpack.c.h.b16 %v80
    %v314 = vunpack.c.l.b16 %v81
    %v315 = vunpack.c.h.b16 %v81
    %v316 = vunpack.c.l.b16 %v82
    %v317 = vunpack.c.h.b16 %v82
    %v318 = vunpack.c.l.b16 %v83
    %v319 = vunpack.c.h.b16 %v83
    %v320 = vunpack.c.l.b16 %v84
    %v321 = vunpack.c.h.b16 %v84
    %v322 = vunpack.c.l.b16 %v85
    %v323 = vunpack.c.h.b16 %v85
    %v324 = vunpack.c.l.b16 %v86
    %v325 = vunpack.c.h.b16 %v86
    %v326 = vunpack.c.l.b16 %v87
    %v327 = vunpack.c.h.b16 %v87
    %v328 = vunpack.c.l.b16 %v88
    %v329 = vunpack.c.h.b16 %v88
    %v330 = vunpack.c.l.b16 %v89
    %v331 = vunpack.c.h.b16 %v89
    %v332 = vunpack.c.l.b16 %v90
    %v333 = vunpack.c.h.b16 %v90
    %v334 = vunpack.c.l.b16 %v91
    %v335 = vunpack.c.h.b16 %v91
    %v336 = vunpack.c.l.b16 %v92
    %v337 = vunpack.c.h.b16 %v92
    %v338 = vunpack.c.l.b16 %v93
    %v339 = vunpack.c.h.b16 %v93
    %v340 = vunpack.c.l.b16 %v94
    %v341 = vunpack.c.h.b16 %v94
    %v342 = vunpack.c.l.b16 %v95
    %v343 = vunpack.c.h.b16 %v95
    %v344 = vunpack.c.l.b16 %v96
    %v345 = vunpack.c.h.b16 %v96
    %v346 = vunpack.c.l.b16 %v97
    %v347 = vunpack.c.h.b16 %v97
    %v348 = vunpack.c.l.b16 %v98
    %v349 = vunpack.c.h.b16 %v98
    %v350 = vunpack.c.l.b16 %v99
    %v351 = vunpack.c.h.b16 %v99
    %v352 = vunpack.c.l.b16 %v100
    %v353 = vunpack.c.h.b16 %v100
    %v354 = vunpack.c.l.b16 %v101
    %v355 = vunpack.c.h.b16 %v101
    %v356 = vunpack.c.l.b16 %v102
    %v357 = vunpack.c.h.b16 %v102
    %v358 = vunpack.c.l.b16 %v103
    %v359 = vunpack.c.h.b16 %v103
    %v360 = vunpack.c.l.b16 %v104
    %v361 = vunpack.c.h.b16 %v104
    %v362 = vunpack.c.l.b16 %v105
    %v363 = vunpack.c.h.b16 %v105
    %v364 = vunpack.c.l.b16 %v106
    %v365 = vunpack.c.h.b16 %v106
    %v366 = vunpack.c.l.b16 %v107
    %v367 = vunpack.c.h.b16 %v107
    %v368 = vunpack.c.l.b16 %v108
    %v369 = vunpack.c.h.b16 %v108
    %v370 = vunpack.c.l.b16 %v109
    %v371 = vunpack.c.h.b16 %v109
    %v372 = vunpack.c.l.b16 %v110
    %v373 = vunpack.c.h.b16 %v110
    %v374 = vunpack.c.l.b16 %v111
    %v375 = vunpack.c.h.b16 %v111
    %v376 = vunpack.c.l.b16 %v112
    %v377 = vunpack.c.h.b16 %v112
    %v378 = vunpack.c.l.b16 %v113
    %v379 = vunpack.c.h.b16 %v113
    %v380 = vunpack.c.l.b16 %v114
    %v381 = vunpack.c.h.b16 %v114
    %v382 = vunpack.c.l.b16 %v115
    %v383 = vunpack.c.h.b16 %v115
    %v384 = vunpack.c.l.b16 %v116
    %v385 = vunpack.c.h.b16 %v116
    %v386 = vunpack.c.l.b16 %v117
    %v387 = vunpack.c.h.b16 %v117
    %v388 = vunpack.c.l.b16 %v118
    %v389 = vunpack.c.h.b16 %v118
    %v390 = vunpack.c.l.b16 %v119
    %v391 = vunpack.c.h.b16 %v119
    %v392 = vunpack.c.l.b16 %v120
    %v393 = vunpack.c.h.b16 %v120
    %v394 = vunpack.c.l.b16 %v121
    %v395 = vunpack.c.h.b16 %v121
    %v396 = vunpack.c.l.b16 %v122
    %v397 = vunpack.c.h.b16 %v122
    %v398 = vunpack.c.l.b16 %v123
    %v399 = vunpack.c.h.b16 %v123
    %v400 = vunpack.c.l.b16 %v124
    %v401 = vunpack.c.h.b16 %v124
    %v402 = vunpack.c.l.b16 %v125
    %v403 = vunpack.c.h.b16 %v125
    %v404 = vunpack.c.l.b16 %v126
    %v405 = vunpack.c.h.b16 %v126
    %v406 = vunpack.c.l.b16 %v127
    %v407 = vunpack.c.h.b16 %v127
    %v408 = vunpack.c.l.b16 %v128
    %v409 = vunpack.c.h.b16 %v128
    %v410 = vunpack.c.l.b16 %v129
    %v411 = vunpack.c.h.b16 %v129
    %v412 = vunpack.c.l.b16 %v130
    %v413 = vunpack.c.h.b16 %v130
    %v414 = vunpack.c.l.b16 %v131
    %v415 = vunpack.c.h.b16 %v131
    %v416 = vunpack.c.l.b16 %v132
    %v417 = vunpack.c.h.b16 %v132
    %v418 = vunpack.c.l.b16 %v133
    %v419 = vunpack.c.h.b16 %v133
    %v420 = vunpack.c.l.b16 %v134
    %v421 = vunpack.c.h.b16 %v134
    %v422 = vunpack.c.l.b16 %v135
    %v423 = vunpack.c.h.b16 %v135
    %v424 = vunpack.c.l.b16 %v136
    %v425 = vunpack.c.h.b16 %v136
    %v426 = vunpack.c.l.b16 %v137
    %v427 = vunpack.c.h.b16 %v137
    %v428 = vunpack.c.l.b16 %v138
    %v429 = vunpack.c.h.b16 %v138
    %v430 = vunpack.c.l.b16 %v139
    %v431 = vunpack.c.h.b16 %v139
    %v432 = vunpack.c.l.b16 %v140
    %v433 = vunpack.c.h.b16 %v140
    %v434 = vunpack.c.l.b16 %v141
    %v435 = vunpack.c.h.b16 %v141
    %v436 = vunpack.c.l.b16 %v142
    %v437 = vunpack.c.h.b16 %v142
    %v438 = vunpack.c.l.b16 %v143
    %v439 = vunpack.c.h.b16 %v143
    %v440 = vunpack.c.l.b16 %v144
    %v441 = vunpack.c.h.b16 %v144
    %v442 = vunpack.c.l.b16 %v145
    %v443 = vunpack.c.h.b16 %v145
    %v444 = vunpack.c.l.b16 %v146
    %v445 = vunpack.c.h.b16 %v146
    %v446 = vunpack.c.l.b16 %v147
    %v447 = vunpack.c.h.b16 %v147
    %v448 = vunpack.c.l.b16 %v148
    %v449 = vunpack.c.h.b16 %v148
    %v450 = vunpack.c.l.b16 %v149
    %v451 = vunpack.c.h.b16 %v149
    %v452 = vunpack.c.l.b16 %v150
    %v453 = vunpack.c.h.b16 %v150
    %v454 = vunpack.c.l.b16 %v151
    %v455 = vunpack.c.h.b16 %v151
    %v456 = vunpack.c.l.b16 %v152
    %v457 = vunpack.c.h.b16 %v152
    %v458 = vunpack.c.l.b16 %v153
    %v459 = vunpack.c.h.b16 %v153
    %v460 = vpack.c.b16 %v266, %v264
    %v461 = vpack.c.b16 %v267, %v265
    %v462 = vpack.c.b16 %v270, %v268
    %v463 = vpack.c.b16 %v271, %v269
    %v464 = vpack.c.b16 %v274, %v272
    %v465 = vpack.c.b16 %v275, %v273
    %v466 = vpack.c.b16 %v278, %v276
    %v467 = vpack.c.b16 %v279, %v277
    %v468 = vpack.c.b16 %v282, %v280
    %v469 = vpack.c.b16 %v283, %v281
    %v470 = vpack.c.b16 %v286, %v284
    %v471 = vpack.c.b16 %v287, %v285
    %v472 = vpack.c.b16 %v290, %v288
    %v473 = vpack.c.b16 %v291, %v289
    %v474 = vpack.c.b16 %v294, %v292
    %v475 = vpack.c.b16 %v295, %v293
    %v476 = vpack.c.b16 %v298, %v296
    %v477 = vpack.c.b16 %v299, %v297
    %v478 = vpack.c.b16 %v302, %v300
    %v479 = vpack.c.b16 %v303, %v301
    %v480 = vpack.c.b16 %v306, %v304
    %v481 = vpack.c.b16 %v307, %v305
    %v482 = vpack.c.b16 %v310, %v308
    %v483 = vpack.c.b16 %v311, %v309
    %v484 = vpack.c.b16 %v314, %v312
    %v485 = vpack.c.b16 %v315, %v313
    %v486 = vpack.c.b16 %v318, %v316
    %v487 = vpack.c.b16 %v319, %v317
    %v488 = vpack.c.b16 %v322, %v320
    %v489 = vpack.c.b16 %v323, %v321
    %v490 = vpack.c.b16 %v326, %v324
    %v491 = vpack.c.b16 %v327, %v325
    %v492 = vpack.c.b16 %v330, %v328
    %v493 = vpack.c.b16 %v331, %v329
    %v494 = vpack.c.b16 %v334, %v332
    %v495 = vpack.c.b16 %v335, %v333
    %v496 = vpack.c.b16 %v338, %v336
    %v497 = vpack.c.b16 %v339, %v337
    %v498 = vpack.c.b16 %v342, %v340
    %v499 = vpack.c.b16 %v343, %v341
    %v500 = vpack.c.b16 %v346, %v344
    %v501 = vpack.c.b16 %v347, %v345
    %v502 = vpack.c.b16 %v350, %v348
    %v503 = vpack.c.b16 %v351, %v349
    %v504 = vpack.c.b16 %v354, %v352
    %v505 = vpack.c.b16 %v355, %v353
    %v506 = vpack.c.b16 %v358, %v356
    %v507 = vpack.c.b16 %v359, %v357
    %v508 = vpack.c.b16 %v362, %v360
    %v509 = vpack.c.b16 %v363, %v361
    %v510 = vpack.c.b16 %v366, %v364
    %v511 = vpack.c.b16 %v367, %v365
    %v512 = vpack.c.b16 %v370, %v368
    %v513 = vpack.c.b16 %v371, %v369
    %v514 = vpack.c.b16 %v374, %v372
    %v515 = vpack.c.b16 %v375, %v373
    %v516 = vpack.c.b16 %v378, %v376
    %v517 = vpack.c.b16 %v379, %v377
    %v518 = vpack.c.b16 %v382, %v380
    %v519 = vpack.c.b16 %v383, %v381
    %v520 = vpack.c.b16 %v386, %v384
    %v521 = vpack.c.b16 %v387, %v385
    %v522 = vpack.c.b16 %v390, %v388
    %v523 = vpack.c.b16 %v391, %v389
    %v524 = vpack.c.b16 %v394, %v392
    %v525 = vpack.c.b16 %v395, %v393
    %v526 = vpack.c.b16 %v398, %v396
    %v527 = vpack.c.b16 %v399, %v397
    %v528 = vpack.c.b16 %v402, %v400
    %v529 = vpack.c.b16 %v403, %v401
    %v530 = vpack.c.b16 %v406, %v404
    %v531 = vpack.c.b16 %v407, %v405
    %v532 = vpack.c.b16 %v410, %v408
    %v533 = vpack.c.b16 %v411, %v409
    %v534 = vpack.c.b16 %v414, %v412
    %v535 = vpack.c.b16 %v415, %v413
    %v536 = vpack.c.b16 %v418, %v416
    %v537 = vpack.c.b16 %v419, %v417
    %v538 = vpack.c.b16 %v422, %v420
    %v539 = vpack.c.b16 %v423, %v421
    %v540 = vpack.c.b16 %v426, %v424
    %v541 = vpack.c.b16 %v427, %v425
    %v542 = vpack.c.b16 %v430, %v428
    %v543 = vpack.c.b16 %v431, %v429
    %v544 = vpack.c.b16 %v434, %v432
    %v545 = vpack.c.b16 %v435, %v433
    %v546 = vpack.c.b16 %v438, %v436
    %v547 = vpack.c.b16 %v439, %v437
    %v548 = vpack.c.b16 %v442, %v440
    %v549 = vpack.c.b16 %v443, %v441
    %v550 = vpack.c.b16 %v446, %v444
    %v551 = vpack.c.b16 %v447, %v445
    %v552 = vpack.c.b16 %v450, %v448
    %v553 = vpack.c.b16 %v451, %v449
    %v554 = vpack.c.b16 %v454, %v452
    %v555 = vpack.c.b16 %v455, %v453
    %v556 = vpack.c.b16 %v458, %v456
    %v557 = vpack.c.b16 %v459, %v457
    %vm656 = vcmask 130048
    %v658 = vsel %vm656, %v55, 0
    %660 = vmatprep.subr.bf16.mxu0 %v461
    %661 = vmatpush1.bf16.msra.mxu0 %v460
    %662 = vmatprep.subr.bf16.mxu0 %v463
    %663 = vmatpush1.bf16.msra.mxu0 %v462
    %664 = vmatprep.subr.bf16.mxu0 %v465
    %665 = vmatpush1.bf16.msra.mxu0 %v464
    %666 = vmatprep.subr.bf16.mxu0 %v467
    %667 = vmatpush1.bf16.msra.mxu0 %v466
    %668 = vmatprep.subr.bf16.mxu0 %v469
    %669 = vmatpush1.bf16.msra.mxu0 %v468
    %670 = vmatprep.subr.bf16.mxu0 %v471
    %671 = vmatpush1.bf16.msra.mxu0 %v470
    %672 = vmatprep.subr.bf16.mxu0 %v473
    %673 = vmatpush1.bf16.msra.mxu0 %v472
    %674 = vmatprep.subr.bf16.mxu0 %v475
    %675 = vmatpush1.bf16.msra.mxu0 %v474
    %676 = vmatprep.subr.bf16.mxu0 %v477
    %677 = vmatpush1.bf16.msra.mxu0 %v476
    %678 = vmatprep.subr.bf16.mxu0 %v479
    %679 = vmatpush1.bf16.msra.mxu0 %v478
    %680 = vmatprep.subr.bf16.mxu0 %v481
    %681 = vmatpush1.bf16.msra.mxu0 %v480
    %682 = vmatprep.subr.bf16.mxu0 %v483
    %683 = vmatpush1.bf16.msra.mxu0 %v482
    %684 = vmatprep.subr.bf16.mxu0 %v485
    %685 = vmatpush1.bf16.msra.mxu0 %v484
    %686 = vmatprep.subr.bf16.mxu0 %v487
    %687 = vmatpush1.bf16.msra.mxu0 %v486
    %688 = vmatprep.subr.bf16.mxu0 %v489
    %689 = vmatpush1.bf16.msra.mxu0 %v488
    %690 = vmatprep.subr.bf16.mxu0 %v491
    %691 = vmatpush1.bf16.msra.mxu0 %v490
    %692 = vmatprep.mubr.bf16.mxu0 %v50
    %693 = vmatmul.mubr.bf16.gmra.mrb[0].mxu0 %v49
    %v694 = vpop.f32.mrb[0].mxu0
    %v695 = vadd.f32 %v159, %v694
    %v696 = vpop.f32.mrb[0].mxu0
    %v697 = vadd.f32 %v163, %v696
    %v698 = vpop.f32.mrb[0].mxu0
    %v699 = vpop.f32.mrb[0].mxu0
    %700 = vdwg.mxu0
    %701 = vmatprep.subr.bf16.mxu0 %v493
    %702 = vmatpush1.bf16.msra.mxu0 %v492
    %703 = vmatprep.subr.bf16.mxu0 %v495
    %704 = vmatpush1.bf16.msra.mxu0 %v494
    %705 = vmatprep.subr.bf16.mxu0 %v497
    %706 = vmatpush1.bf16.msra.mxu0 %v496
    %707 = vmatprep.subr.bf16.mxu0 %v499
    %708 = vmatpush1.bf16.msra.mxu0 %v498
    %709 = vmatprep.subr.bf16.mxu0 %v501
    %710 = vmatpush1.bf16.msra.mxu0 %v500
    %711 = vmatprep.subr.bf16.mxu0 %v503
    %712 = vmatpush1.bf16.msra.mxu0 %v502
    %713 = vmatprep.subr.bf16.mxu0 %v505
    %714 = vmatpush1.bf16.msra.mxu0 %v504
    %715 = vmatprep.subr.bf16.mxu0 %v507
    %716 = vmatpush1.bf16.msra.mxu0 %v506
    %717 = vmatprep.subr.bf16.mxu0 %v509
    %718 = vmatpush1.bf16.msra.mxu0 %v508
    %719 = vmatprep.subr.bf16.mxu0 %v511
    %720 = vmatpush1.bf16.msra.mxu0 %v510
    %721 = vmatprep.subr.bf16.mxu0 %v513
    %722 = vmatpush1.bf16.msra.mxu0 %v512
    %723 = vmatprep.subr.bf16.mxu0 %v515
    %724 = vmatpush1.bf16.msra.mxu0 %v514
    %725 = vmatprep.subr.bf16.mxu0 %v517
    %726 = vmatpush1.bf16.msra.mxu0 %v516
    %727 = vmatprep.subr.bf16.mxu0 %v519
    %728 = vmatpush1.bf16.msra.mxu0 %v518
    %729 = vmatprep.subr.bf16.mxu0 %v521
    %730 = vmatpush1.bf16.msra.mxu0 %v520
    %731 = vmatprep.subr.bf16.mxu0 %v523
    %732 = vmatpush1.bf16.msra.mxu0 %v522
    %733 = vmatprep.mubr.bf16.mxu0 %v52
    %734 = vmatmul.mubr.bf16.gmra.mrb[0].mxu0 %v51
    %v735 = vpop.f32.mrb[0].mxu0
    %v736 = vadd.f32 %v695, %v735
    %v737 = vpop.f32.mrb[0].mxu0
    %v738 = vadd.f32 %v697, %v737
    %v739 = vpop.f32.mrb[0].mxu0
    %v740 = vpop.f32.mrb[0].mxu0
    %741 = vdwg.mxu0
    %742 = vmatprep.subr.bf16.mxu0 %v525
    %743 = vmatpush1.bf16.msra.mxu0 %v524
    %744 = vmatprep.subr.bf16.mxu0 %v527
    %745 = vmatpush1.bf16.msra.mxu0 %v526
    %746 = vmatprep.subr.bf16.mxu0 %v529
    %747 = vmatpush1.bf16.msra.mxu0 %v528
    %748 = vmatprep.subr.bf16.mxu0 %v531
    %749 = vmatpush1.bf16.msra.mxu0 %v530
    %750 = vmatprep.subr.bf16.mxu0 %v533
    %751 = vmatpush1.bf16.msra.mxu0 %v532
    %752 = vmatprep.subr.bf16.mxu0 %v535
    %753 = vmatpush1.bf16.msra.mxu0 %v534
    %754 = vmatprep.subr.bf16.mxu0 %v537
    %755 = vmatpush1.bf16.msra.mxu0 %v536
    %756 = vmatprep.subr.bf16.mxu0 %v539
    %757 = vmatpush1.bf16.msra.mxu0 %v538
    %758 = vmatprep.subr.bf16.mxu0 %v541
    %759 = vmatpush1.bf16.msra.mxu0 %v540
    %760 = vmatprep.subr.bf16.mxu0 %v543
    %761 = vmatpush1.bf16.msra.mxu0 %v542
    %762 = vmatprep.subr.bf16.mxu0 %v545
    %763 = vmatpush1.bf16.msra.mxu0 %v544
    %764 = vmatprep.subr.bf16.mxu0 %v547
    %765 = vmatpush1.bf16.msra.mxu0 %v546
    %766 = vmatprep.subr.bf16.mxu0 %v549
    %767 = vmatpush1.bf16.msra.mxu0 %v548
    %768 = vmatprep.subr.bf16.mxu0 %v551
    %769 = vmatpush1.bf16.msra.mxu0 %v550
    %770 = vmatprep.subr.bf16.mxu0 %v553
    %771 = vmatpush1.bf16.msra.mxu0 %v552
    %772 = vmatprep.subr.bf16.mxu0 %v555
    %773 = vmatpush1.bf16.msra.mxu0 %v554
    %774 = vmatprep.mubr.bf16.mxu0 %v54
    %775 = vmatmul.mubr.bf16.gmra.mrb[0].mxu0 %v53
    %v776 = vpop.f32.mrb[0].mxu0
    %v777 = vadd.f32 %v736, %v776
    %v778 = vpop.f32.mrb[0].mxu0
    %v779 = vadd.f32 %v738, %v778
    %v780 = vpop.f32.mrb[0].mxu0
    %v781 = vpop.f32.mrb[0].mxu0
    %782 = vdwg.mxu0
    %783 = vmatprep.subr.bf16.mxu0 %v557
    %784 = vmatpush1.bf16.msra.mxu0 %v556
    %785 = vmatprep.subr.bf16.mxu0 0
    %786 = vmatpush1.bf16.msra.mxu0 0
    %787 = vmatprep.subr.bf16.mxu0 0
    %788 = vmatpush1.bf16.msra.mxu0 0
    %789 = vmatprep.subr.bf16.mxu0 0
    %790 = vmatpush1.bf16.msra.mxu0 0
    %791 = vmatprep.subr.bf16.mxu0 0
    %792 = vmatpush1.bf16.msra.mxu0 0
    %793 = vmatprep.subr.bf16.mxu0 0
    %794 = vmatpush1.bf16.msra.mxu0 0
    %795 = vmatprep.subr.bf16.mxu0 0
    %796 = vmatpush1.bf16.msra.mxu0 0
    %797 = vmatprep.subr.bf16.mxu0 0
    %798 = vmatpush1.bf16.msra.mxu0 0
    %799 = vmatprep.subr.bf16.mxu0 0
    %800 = vmatpush1.bf16.msra.mxu0 0
    %801 = vmatprep.subr.bf16.mxu0 0
    %802 = vmatpush1.bf16.msra.mxu0 0
    %803 = vmatprep.subr.bf16.mxu0 0
    %804 = vmatpush1.bf16.msra.mxu0 0
    %805 = vmatprep.subr.bf16.mxu0 0
    %806 = vmatpush1.bf16.msra.mxu0 0
    %807 = vmatprep.subr.bf16.mxu0 0
    %808 = vmatpush1.bf16.msra.mxu0 0
    %809 = vmatprep.subr.bf16.mxu0 0
    %810 = vmatpush1.bf16.msra.mxu0 0
    %811 = vmatprep.subr.bf16.mxu0 0
    %812 = vmatpush1.bf16.msra.mxu0 0
    %813 = vmatprep.subr.bf16.mxu0 0
    %814 = vmatpush1.bf16.msra.mxu0 0
    %815 = vmatprep.mubr.bf16.mxu0 0
    %816 = vmatmul.mubr.bf16.gmra.mrb[0].mxu0 %v658
    %v817 = vpop.f32.mrb[0].mxu0
    %v818 = vadd.f32 %v777, %v817
    %v819 = vpop.f32.mrb[0].mxu0
    %v820 = vadd.f32 %v779, %v819
    %v821 = vpop.f32.mrb[0].mxu0
    %v822 = vpop.f32.mrb[0].mxu0
    %823 = vdwg.mxu0
    %v824 = vmax.f32 %v818, 0.0
    %v825 = vmax.f32 %v820, 0.0
    %v826 = vpack.c.bf16 %v824, %v824
    %v827 = vpack.c.bf16 %v825, %v825
    %v828 = vld [vmem:[%s3] sm:$0xf]
    %v829 = vld [vmem:[%s3 + $0x4] sm:$0xf]
    %v830 = vld [vmem:[%s3 + $0x8] sm:$0xf]
    %v831 = vld [vmem:[%s3 + $0xc] sm:$0xf]
    %v832 = vld [vmem:[%s3 + $0x10] sm:$0xf]
    %v833 = vld [vmem:[%s3 + $0x14] sm:$0xf]
    %v834 = vld [vmem:[%s3 + $0x18] sm:$0xf]
    %v835 = vld [vmem:[%s3 + $0x1c] sm:$0xf]
    %v836 = vld [vmem:[%s3 + $0x20] sm:$0xf]
    %v837 = vld [vmem:[%s3 + $0x24] sm:$0xf]
    %v838 = vld [vmem:[%s3 + $0x28] sm:$0xf]
    %v839 = vld [vmem:[%s3 + $0x2c] sm:$0xf]
    %v840 = vld [vmem:[%s3 + $0x30] sm:$0xf]
    %v841 = vld [vmem:[%s3 + $0x34] sm:$0xf]
    %v842 = vld [vmem:[%s3 + $0x38] sm:$0xf]
    %v843 = vld [vmem:[%s3 + $0x3c] sm:$0xf]
    %v844 = vld [vmem:[%s3 + $0x40] sm:$0xf]
    %v845 = vld [vmem:[%s3 + $0x44] sm:$0xf]
    %v846 = vld [vmem:[%s3 + $0x48] sm:$0xf]
    %v847 = vld [vmem:[%s3 + $0x4c] sm:$0xf]
    %v848 = vld [vmem:[%s3 + $0x50] sm:$0xf]
    %v849 = vld [vmem:[%s3 + $0x54] sm:$0xf]
    %v850 = vld [vmem:[%s3 + $0x58] sm:$0xf]
    %v851 = vld [vmem:[%s3 + $0x5c] sm:$0xf]
    %v852 = vld [vmem:[%s3 + $0x60] sm:$0xf]
    %v853 = vld [vmem:[%s3 + $0x64] sm:$0xf]
    %v854 = vld [vmem:[%s3 + $0x68] sm:$0xf]
    %v855 = vld [vmem:[%s3 + $0x6c] sm:$0xf]
    %v856 = vld [vmem:[%s3 + $0x70] sm:$0xf]
    %v857 = vld [vmem:[%s3 + $0x74] sm:$0xf]
    %v858 = vld [vmem:[%s3 + $0x78] sm:$0xf]
    %v859 = vld [vmem:[%s3 + $0x7c] sm:$0xf]
    %v860 = vld [vmem:[%s4] sm:$0x1]
    %v862 = vlaneseq
    %v863 = vshrl.u32 %v862, 7
    %v864 = vsub.s32 0, %v863
    %v865 = vrot.slane %v860, %v864
    %v899 = vunpack.c.l.b16 %v828
    %v900 = vunpack.c.l.b16 %v829
    %v901 = vunpack.c.l.b16 %v830
    %v902 = vunpack.c.l.b16 %v831
    %v903 = vunpack.c.l.b16 %v832
    %v904 = vunpack.c.l.b16 %v833
    %v905 = vunpack.c.l.b16 %v834
    %v906 = vunpack.c.l.b16 %v835
    %v907 = vunpack.c.l.b16 %v836
    %v908 = vunpack.c.l.b16 %v837
    %v909 = vunpack.c.l.b16 %v838
    %v910 = vunpack.c.l.b16 %v839
    %v911 = vunpack.c.l.b16 %v840
    %v912 = vunpack.c.l.b16 %v841
    %v913 = vunpack.c.l.b16 %v842
    %v914 = vunpack.c.l.b16 %v843
    %v915 = vunpack.c.l.b16 %v844
    %v916 = vunpack.c.l.b16 %v845
    %v917 = vunpack.c.l.b16 %v846
    %v918 = vunpack.c.l.b16 %v847
    %v919 = vunpack.c.l.b16 %v848
    %v920 = vunpack.c.l.b16 %v849
    %v921 = vunpack.c.l.b16 %v850
    %v922 = vunpack.c.l.b16 %v851
    %v923 = vunpack.c.l.b16 %v852
    %v924 = vunpack.c.l.b16 %v853
    %v925 = vunpack.c.l.b16 %v854
    %v926 = vunpack.c.l.b16 %v855
    %v927 = vunpack.c.l.b16 %v856
    %v928 = vunpack.c.l.b16 %v857
    %v929 = vunpack.c.l.b16 %v858
    %v930 = vunpack.c.l.b16 %v859
    %v931 = vpack.c.b16 %v900, %v899
    %v932 = vpack.c.b16 %v902, %v901
    %v933 = vpack.c.b16 %v904, %v903
    %v934 = vpack.c.b16 %v906, %v905
    %v935 = vpack.c.b16 %v908, %v907
    %v936 = vpack.c.b16 %v910, %v909
    %v937 = vpack.c.b16 %v912, %v911
    %v938 = vpack.c.b16 %v914, %v913
    %v939 = vpack.c.b16 %v916, %v915
    %v940 = vpack.c.b16 %v918, %v917
    %v941 = vpack.c.b16 %v920, %v919
    %v942 = vpack.c.b16 %v922, %v921
    %v943 = vpack.c.b16 %v924, %v923
    %v944 = vpack.c.b16 %v926, %v925
    %v945 = vpack.c.b16 %v928, %v927
    %v946 = vpack.c.b16 %v930, %v929
    %963 = vmatprep.subr.bf16.mxu0 0
    %964 = vmatpush1.bf16.msra.mxu0 %v931
    %965 = vmatprep.subr.bf16.mxu0 0
    %966 = vmatpush1.bf16.msra.mxu0 %v932
    %967 = vmatprep.subr.bf16.mxu0 0
    %968 = vmatpush1.bf16.msra.mxu0 %v933
    %969 = vmatprep.subr.bf16.mxu0 0
    %970 = vmatpush1.bf16.msra.mxu0 %v934
    %971 = vmatprep.subr.bf16.mxu0 0
    %972 = vmatpush1.bf16.msra.mxu0 %v935
    %973 = vmatprep.subr.bf16.mxu0 0
    %974 = vmatpush1.bf16.msra.mxu0 %v936
    %975 = vmatprep.subr.bf16.mxu0 0
    %976 = vmatpush1.bf16.msra.mxu0 %v937
    %977 = vmatprep.subr.bf16.mxu0 0
    %978 = vmatpush1.bf16.msra.mxu0 %v938
    %979 = vmatprep.subr.bf16.mxu0 0
    %980 = vmatpush1.bf16.msra.mxu0 %v939
    %981 = vmatprep.subr.bf16.mxu0 0
    %982 = vmatpush1.bf16.msra.mxu0 %v940
    %983 = vmatprep.subr.bf16.mxu0 0
    %984 = vmatpush1.bf16.msra.mxu0 %v941
    %985 = vmatprep.subr.bf16.mxu0 0
    %986 = vmatpush1.bf16.msra.mxu0 %v942
    %987 = vmatprep.subr.bf16.mxu0 0
    %988 = vmatpush1.bf16.msra.mxu0 %v943
    %989 = vmatprep.subr.bf16.mxu0 0
    %990 = vmatpush1.bf16.msra.mxu0 %v944
    %991 = vmatprep.subr.bf16.mxu0 0
    %992 = vmatpush1.bf16.msra.mxu0 %v945
    %993 = vmatprep.subr.bf16.mxu0 0
    %994 = vmatpush1.bf16.msra.mxu0 %v946
    %995 = vmatprep.mubr.bf16.mxu0 %v827
    %996 = vmatmul.mubr.bf16.gmra.mrb[0].mxu0 %v826
    %v997 = vpop.f32.mrb[0].mxu0
    %v998 = vadd.f32 %v865, %v997
    %v999 = vpop.f32.mrb[0].mxu0
    %v1000 = vpop.f32.mrb[0].mxu0
    %v1001 = vpop.f32.mrb[0].mxu0
    %1002 = vdwg.mxu0
    %v1003 = vmax.f32 %v998, 0.0
    %v1004 = vpack.c.bf16 %v1003, %v1003
    %v1005 = vld [vmem:[%s5] sm:$0xf]
    %v1006 = vld [vmem:[%s5 + $0x4] sm:$0xf]
    %v1007 = vld [vmem:[%s5 + $0x8] sm:$0xf]
    %v1008 = vld [vmem:[%s5 + $0xc] sm:$0xf]
    %v1009 = vld [vmem:[%s6] sm:$0x1]
    %v1011 = vlaneseq
    %v1012 = vshrl.u32 %v1011, 7
    %v1013 = vsub.s32 0, %v1012
    %v1014 = vrot.slane %v1009, %v1013
    %v1020 = vunpack.c.l.b16 %v1005
    %v1021 = vunpack.c.l.b16 %v1006
    %v1022 = vunpack.c.l.b16 %v1007
    %v1023 = vunpack.c.l.b16 %v1008
    %v1024 = vpack.c.b16 %v1021, %v1020
    %v1025 = vpack.c.b16 %v1023, %v1022
    %vm1028 = vcmask 261120
    %v1030 = vsel %vm1028, %v1004, 0
    %1032 = vmatprep.subr.bf16.mxu0 0
    %1033 = vmatpush1.bf16.msra.mxu0 %v1024
    %1034 = vmatprep.subr.bf16.mxu0 0
    %1035 = vmatpush1.bf16.msra.mxu0 %v1025
    %1036 = vmatprep.subr.bf16.mxu0 0
    %1037 = vmatpush1.bf16.msra.mxu0 0
    %1038 = vmatprep.subr.bf16.mxu0 0
    %1039 = vmatpush1.bf16.msra.mxu0 0
    %1040 = vmatprep.subr.bf16.mxu0 0
    %1041 = vmatpush1.bf16.msra.mxu0 0
    %1042 = vmatprep.subr.bf16.mxu0 0
    %1043 = vmatpush1.bf16.msra.mxu0 0
    %1044 = vmatprep.subr.bf16.mxu0 0
    %1045 = vmatpush1.bf16.msra.mxu0 0
    %1046 = vmatprep.subr.bf16.mxu0 0
    %1047 = vmatpush1.bf16.msra.mxu0 0
    %1048 = vmatprep.subr.bf16.mxu0 0
    %1049 = vmatpush1.bf16.msra.mxu0 0
    %1050 = vmatprep.subr.bf16.mxu0 0
    %1051 = vmatpush1.bf16.msra.mxu0 0
    %1052 = vmatprep.subr.bf16.mxu0 0
    %1053 = vmatpush1.bf16.msra.mxu0 0
    %1054 = vmatprep.subr.bf16.mxu0 0
    %1055 = vmatpush1.bf16.msra.mxu0 0
    %1056 = vmatprep.subr.bf16.mxu0 0
    %1057 = vmatpush1.bf16.msra.mxu0 0
    %1058 = vmatprep.subr.bf16.mxu0 0
    %1059 = vmatpush1.bf16.msra.mxu0 0
    %1060 = vmatprep.subr.bf16.mxu0 0
    %1061 = vmatpush1.bf16.msra.mxu0 0
    %1062 = vmatprep.subr.bf16.mxu0 0
    %1063 = vmatpush1.bf16.msra.mxu0 0
    %1064 = vmatprep.mubr.bf16.mxu0 0
    %1065 = vmatmul.mubr.bf16.gmra.mrb[0].mxu0 %v1030
    %v1066 = vpop.f32.mrb[0].mxu0
    %v1067 = vadd.f32 %v1014, %v1066
    %v1068 = vpop.f32.mrb[0].mxu0
    %v1069 = vpop.f32.mrb[0].mxu0
    %v1070 = vpop.f32.mrb[0].mxu0
    %1071 = vdwg.mxu0
    %1072 = vmax.xlane.f32.xlu0 %v1067
    %v1073 = vpop.xlane.xlu0 %1072
    %v1074 = vsub.f32 %v1067, %v1073
    %v1075 = vmul.f32 %v1074, 1.442695
    %v1076 = vpow.pop %v1075
    %1077 = vadd.xlane.f32.xlu0 %v1076
    %v1078 = vpop.xlane.xlu0 %1077
    %v1079 = vrcp.pop %v1078
    %v1080 = vmul.f32 %v1076, %v1079
    %v1081 = vpack.c.bf16 %v1080, %v1080
    %1082 = vst [vmem:[#allocation5] sm:$0xf] %v1081
    // Predicated region
    $region34: #{tpu_custom_call.1} parent=1 // pred_check
      _
    $region35: #{tpu_custom_call.1} parent=1 // pred_check_branch
      %1084 = sbr.rel (0) target = $region37
    $region36: #{tpu_custom_call.1} parent=1 // pred_region
      %s1086 = ssub.s32 64, 64
      %1087 = vsyncadd [#allocation4], %s1086
      %s1089 = sshll.u32 [#allocation5], 4
      %s1090 = int_to_ptr.vmem [resolvable:$true] %s1089
      %1092 = dma.vmem_to_hbm [thread:$0]  %s1090, 64, %s7, [#allocation4]
    $region37: #{tpu_custom_call.1} parent=1 // pred_fallthru
      _
    // Predicated region
    $region38: #{tpu_custom_call.1} parent=1 // pred_check
      _
    $region39: #{tpu_custom_call.1} parent=1 // pred_check_branch
      %1094 = sbr.rel (0) target = $region41
    $region40: #{tpu_custom_call.1} parent=1 // pred_region
      %1095 = dma.done [#allocation4], 64
    $region41: #{tpu_custom_call.1} parent=1 // pred_fallthru
      _
    %1096 = vsyncpa [#allocation3], 1
    %1097 = vsyncpa [#allocation4], 1

</llo_original>
